<compile_context>
chip_gen: v5e
topology: v5e:2x2
jax: 0.10.0
libtpu: 0.0.40
codegen_flags: <defaults>
</compile_context>

<pallas_src>
import jax
import jax.numpy as jnp
from jax.experimental import pallas as pl
from jax.experimental.pallas import tpu as pltpu

# Hyperparameters (stand-ins for args.in_dim / args.emb_dim / len(domains))
IN_DIM = 16
EMB_DIM = 32
N_DOMAINS = 8
BATCH = 2


def _domain_pointer_kernel(x_ref, dom_ref, w_in_ref, b_in_ref,
                           w_out_ref, b_out_ref, o_ref):
    """Fused forward: out[b, d] = W_out . tanh(x[b] + (dom[d] @ W_in + b_in)) + b_out."""
    # linear_in over the domain table: (n_domains, in_dim) @ (in_dim, emb) + (1, emb)
    embed = jnp.dot(dom_ref[...], w_in_ref[...],
                    preferred_element_type=jnp.float32) + b_in_ref[...]

    # Broadcast-add x (B, 1, emb) with embed (1, n_domains, emb) and apply tanh.
    t = jnp.tanh(x_ref[...] + embed[None, :, :])          # (B, n_domains, emb)

    # linear_out (emb -> 1) as a weighted lane-reduction, then squeeze(-1).
    w_out = w_out_ref[...]                                  # (1, emb)
    out = jnp.sum(t * w_out[None, :, :], axis=-1)           # (B, n_domains)
    o_ref[...] = (out + b_out_ref[...]).astype(o_ref.dtype)


def domain_identification_pointer(params, x):
    """x: (B, 1, emb_dim) as in the torch forward. Returns (B, n_domains)."""
    B = x.shape[0]
    dom = params["domain_embed"]
    w_in, b_in = params["w_in"], params["b_in"]
    w_out, b_out = params["w_out"], params["b_out"]
    n_domains, in_dim = dom.shape
    emb = w_in.shape[1]

    flops = (2 * n_domains * in_dim * emb      # linear_in matmul
             + 3 * B * n_domains * emb         # broadcast add + weighted reduce
             + B * n_domains)                  # bias add
    transcendentals = B * n_domains * emb      # tanh
    bytes_accessed = 4 * (x.size + dom.size + w_in.size + b_in.size
                          + w_out.size + b_out.size + B * n_domains)

    vmem = pl.BlockSpec(memory_space=pltpu.MemorySpace.VMEM)
    return pl.pallas_call(
        _domain_pointer_kernel,
        out_shape=jax.ShapeDtypeStruct((B, n_domains), jnp.float32),
        in_specs=[vmem] * 6,
        out_specs=vmem,
        cost_estimate=pl.CostEstimate(
            flops=flops,
            transcendentals=transcendentals,
            bytes_accessed=bytes_accessed),
    )(x, dom, w_in, b_in, w_out, b_out)


def _init_linear(key, fan_in, fan_out):
    """PyTorch-style Linear init: U(-1/sqrt(fan_in), 1/sqrt(fan_in))."""
    kw, kb = jax.random.split(key)
    bound = 1.0 / jnp.sqrt(fan_in)
    # Stored transposed relative to torch: we compute x @ W with W: (fan_in, fan_out).
    w = jax.random.uniform(kw, (fan_in, fan_out), jnp.float32, -bound, bound)
    b = jax.random.uniform(kb, (1, fan_out), jnp.float32, -bound, bound)
    return w, b


def init_params(key, in_dim=IN_DIM, emb_dim=EMB_DIM, n_domains=N_DOMAINS):
    kd, k1, k2 = jax.random.split(key, 3)
    # TODO(synk): stand-in for h5py-loaded per-domain embeddings.
    domain_embed = jax.random.normal(kd, (n_domains, in_dim), jnp.float32)
    w_in, b_in = _init_linear(k1, in_dim, emb_dim)          # linear_in
    w_out_t, b_out = _init_linear(k2, emb_dim, 1)           # linear_out (emb -> 1)
    return {
        "domain_embed": domain_embed,
        "w_in": w_in,
        "b_in": b_in,
        "w_out": w_out_t.T,                                  # keep as (1, emb) row vector
        "b_out": b_out.reshape(1, 1),                        # scalar bias as (1, 1)
    }


def _reference(params, x):
    """Pure-JAX mirror of the torch forward for correctness checking."""
    embed = params["domain_embed"] @ params["w_in"] + params["b_in"]   # (n_domains, emb)
    t = jnp.tanh(x + embed[None, :, :])                                # (B, n_domains, emb)
    out = t @ params["w_out"].T + params["b_out"]                      # (B, n_domains, 1)
    return out[..., 0]


if __name__ == "__main__":
    key = jax.random.PRNGKey(0)
    k_params, k_x = jax.random.split(key)

    params = init_params(k_params)
    # Input matches the torch forward contract: (B, 1, emb_dim).
    x = jax.random.normal(k_x, (BATCH, 1, EMB_DIM), jnp.float32)

    out = domain_identification_pointer(params, x)
    jax.block_until_ready(out)

    ref = _reference(params, x)
    assert out.shape == (BATCH, N_DOMAINS)
    assert jnp.allclose(out, ref, atol=1e-5), float(jnp.max(jnp.abs(out - ref)))

    print("KERNEL_OK")
</pallas_src>

<mosaic_0001>
module attributes {stable_mosaic.version = 11 : i64} {
  func.func @_domain_pointer_kernel(%arg0: memref<2x1x32xf32, #tpu.memory_space<vmem>>, %arg1: memref<8x16xf32, #tpu.memory_space<vmem>>, %arg2: memref<16x32xf32, #tpu.memory_space<vmem>>, %arg3: memref<1x32xf32, #tpu.memory_space<vmem>>, %arg4: memref<1x32xf32, #tpu.memory_space<vmem>>, %arg5: memref<1x1xf32, #tpu.memory_space<vmem>>, %arg6: memref<2x8xf32, #tpu.memory_space<vmem>>) attributes {dimension_semantics = [], scalar_prefetch = 0 : i64, scratch_operands = 0 : i64, tpu.core_type = #tpu.core_type<tc>} {
    %c0 = arith.constant 0 : index
    %c0_0 = arith.constant 0 : index
    %0 = vector.load %arg1[%c0, %c0_0] : memref<8x16xf32, #tpu.memory_space<vmem>>, vector<8x16xf32>
    %c0_1 = arith.constant 0 : index
    %c0_2 = arith.constant 0 : index
    %1 = vector.load %arg2[%c0_1, %c0_2] : memref<16x32xf32, #tpu.memory_space<vmem>>, vector<16x32xf32>
    %cst = arith.constant dense<0.000000e+00> : vector<8x32xf32>
    %2 = tpu.matmul %0, %1, %cst {dimension_numbers = #tpu.dot_dimension_numbers<[1], [0], [0], [1], [0, 0, 1, 1], [], []>} : vector<8x16xf32>, vector<16x32xf32>, vector<8x32xf32> -> vector<8x32xf32>
    %c0_3 = arith.constant 0 : index
    %c0_4 = arith.constant 0 : index
    %3 = vector.load %arg3[%c0_3, %c0_4] : memref<1x32xf32, #tpu.memory_space<vmem>>, vector<1x32xf32>
    %4 = vector.broadcast %3 : vector<1x32xf32> to vector<8x32xf32>
    %5 = arith.addf %2, %4 : vector<8x32xf32>
    %c0_5 = arith.constant 0 : index
    %c0_6 = arith.constant 0 : index
    %c0_7 = arith.constant 0 : index
    %6 = vector.load %arg0[%c0_5, %c0_6, %c0_7] : memref<2x1x32xf32, #tpu.memory_space<vmem>>, vector<2x1x32xf32>
    %7 = vector.shape_cast %5 : vector<8x32xf32> to vector<1x8x32xf32>
    %8 = vector.broadcast %6 : vector<2x1x32xf32> to vector<2x8x32xf32>
    %9 = vector.broadcast %7 : vector<1x8x32xf32> to vector<2x8x32xf32>
    %10 = arith.addf %8, %9 : vector<2x8x32xf32>
    %11 = math.tanh %10 : vector<2x8x32xf32>
    %c0_8 = arith.constant 0 : index
    %c0_9 = arith.constant 0 : index
    %12 = vector.load %arg4[%c0_8, %c0_9] : memref<1x32xf32, #tpu.memory_space<vmem>>, vector<1x32xf32>
    %13 = vector.shape_cast %12 : vector<1x32xf32> to vector<1x1x32xf32>
    %14 = vector.broadcast %13 : vector<1x1x32xf32> to vector<2x8x32xf32>
    %15 = arith.mulf %11, %14 : vector<2x8x32xf32>
    %cst_10 = arith.constant dense<0.000000e+00> : vector<2x8xf32>
    %16 = vector.multi_reduction <add>, %15, %cst_10 [2] : vector<2x8x32xf32> to vector<2x8xf32>
    %c0_11 = arith.constant 0 : index
    %c0_12 = arith.constant 0 : index
    %17 = vector.load %arg5[%c0_11, %c0_12] : memref<1x1xf32, #tpu.memory_space<vmem>>, vector<1x1xf32>
    %18 = vector.broadcast %17 : vector<1x1xf32> to vector<2x8xf32>
    %19 = arith.addf %16, %18 : vector<2x8xf32>
    %c0_13 = arith.constant 0 : index
    %c0_14 = arith.constant 0 : index
    %20 = vector.load %arg6[%c0_13, %c0_14] : memref<2x8xf32, #tpu.memory_space<vmem>>, vector<2x8xf32>
    tpu.vector_store %arg6[%c0_13, %c0_14], %19 {strides = array<i32>} : memref<2x8xf32, #tpu.memory_space<vmem>>, vector<2x8xf32>,
    return
  }
}

</mosaic_0001>

<llo_original>
// kernel: tpu_custom_call.1
$region0: #{tpu_custom_call.1}
  #allocation0 [shape = 'u32[]', space=smem, size = 0x4, offset = 0x4, fixed_abs, tag = 'smem constant byte address 0x4 - core index']
  #allocation1 [shape = 'u32[72,128]{1,0:T(1,128)}', space=vmem, size = 0x9000, scoped, tag = 'internal scratch']
  #allocation2 [shape = 'f32[1,1]{1,0:T(1,128)S(1)}', space=vmem, size = 0x200, scoped, tag = 'scoped memory for tpu_custom_call.1']
  %s0 = inlined_call_operand.vmem [shape: f32[2,1,32], index: 0, kind: input, shape index: {}]
  %s1 = inlined_call_operand.hbm [shape: f32[8,16], index: 1, kind: input, shape index: {}]
  %s2 = inlined_call_operand.hbm [shape: f32[16,32], index: 2, kind: input, shape index: {}]
  %s3 = inlined_call_operand.vmem [shape: f32[1,32], index: 3, kind: input, shape index: {}]
  %s4 = inlined_call_operand.vmem [shape: f32[1,32], index: 4, kind: input, shape index: {}]
  %s5 = inlined_call_operand.<no memory space> [shape: f32[1,1], index: 5, kind: input, shape index: {}]
  %s6 = inlined_call_operand.hbm [shape: f32[2,8], index: 6, kind: output, shape index: {}]
  %s7 = sld [smem:[#allocation0]]
  $region42: #{tpu_custom_call.1} parent=0
    _
  %s9 = ssub.s32 1, %s7
  %s10 = scalar_select 0, %s9, %s7
  %v11 = vstv %s5
  %12 = vst [vmem:[#allocation2] sm:$0x1] %v11
  $region1: #{tpu_custom_call.1} parent=0
    #allocation3 [shape = 'u8[4096]{0}', space=vmem, size = 0x1000, scoped, tag = 'input window, operand 1, single buffered']
    #allocation4 [shape = 's32[1]{0}', space=sflag, size = 0x4, scoped, tag = 'scoped memory for tpu_custom_call.1']
    #allocation5 [shape = 's32[1]{0}', space=sflag, size = 0x4, scoped, tag = 'scoped memory for tpu_custom_call.1']
    #allocation6 [shape = 'u8[8192]{0}', space=vmem, size = 0x2000, scoped, tag = 'input window, operand 2, single buffered']
    #allocation7 [shape = 's32[1]{0}', space=sflag, size = 0x4, scoped, tag = 'scoped memory for tpu_custom_call.1']
    #allocation8 [shape = 'u8[1024]{0}', space=vmem, size = 0x400, scoped, tag = 'output window, operand 0, single buffered']
    %13 = vsyncpa [#allocation4], 0
    %14 = vsyncpa [#allocation7], 0
    %15 = vsyncpa [#allocation5], 0
    // Predicated region
    $region2: #{tpu_custom_call.1} parent=1 // pred_check
      _
    $region3: #{tpu_custom_call.1} parent=1 // pred_check_branch
      %17 = sbr.rel (0) target = $region5
    $region4: #{tpu_custom_call.1} parent=1 // pred_region
      _
    $region5: #{tpu_custom_call.1} parent=1 // pred_fallthru
      _
    // Predicated region
    $region6: #{tpu_custom_call.1} parent=1 // pred_check
      _
    $region7: #{tpu_custom_call.1} parent=1 // pred_check_branch
      %19 = sbr.rel (0) target = $region9
    $region8: #{tpu_custom_call.1} parent=1 // pred_region
      %21 = vsyncadd [#allocation4], 0
      %s23 = sshll.u32 %s1, 4
      %s24 = int_to_ptr.hbm [resolvable:$true] %s23
      %s25 = sshll.u32 [#allocation3], 4
      %s26 = int_to_ptr.vmem [resolvable:$true] %s25
      %28 = dma.hbm_to_vmem [thread:$0]  %s24, 128, %s26, [#allocation4]
    $region9: #{tpu_custom_call.1} parent=1 // pred_fallthru
      _
    // Predicated region
    $region10: #{tpu_custom_call.1} parent=1 // pred_check
      _
    $region11: #{tpu_custom_call.1} parent=1 // pred_check_branch
      %30 = sbr.rel (0) target = $region13
    $region12: #{tpu_custom_call.1} parent=1 // pred_region
      %32 = vsyncadd [#allocation7], 0
      %s33 = sshll.u32 %s2, 4
      %s34 = int_to_ptr.hbm [resolvable:$true] %s33
      %s35 = sshll.u32 [#allocation6], 4
      %s36 = int_to_ptr.vmem [resolvable:$true] %s35
      %41 = dma.hbm_to_vmem [thread:$0]  %s34, 256, %s36, [#allocation7], 128, 128, 8
    $region13: #{tpu_custom_call.1} parent=1 // pred_fallthru
      _
    // Predicated region
    $region14: #{tpu_custom_call.1} parent=1 // pred_check
      _
    $region15: #{tpu_custom_call.1} parent=1 // pred_check_branch
      %43 = sbr.rel (0) target = $region17
    $region16: #{tpu_custom_call.1} parent=1 // pred_region
      _
    $region17: #{tpu_custom_call.1} parent=1 // pred_fallthru
      _
    // Predicated region
    $region18: #{tpu_custom_call.1} parent=1 // pred_check
      _
    $region19: #{tpu_custom_call.1} parent=1 // pred_check_branch
      %45 = sbr.rel (0) target = $region21
    $region20: #{tpu_custom_call.1} parent=1 // pred_region
      _
    $region21: #{tpu_custom_call.1} parent=1 // pred_fallthru
      _
    // Predicated region
    $region22: #{tpu_custom_call.1} parent=1 // pred_check
      _
    $region23: #{tpu_custom_call.1} parent=1 // pred_check_branch
      %47 = sbr.rel (0) target = $region25
    $region24: #{tpu_custom_call.1} parent=1 // pred_region
      _
    $region25: #{tpu_custom_call.1} parent=1 // pred_fallthru
      _
    // Predicated region
    $region26: #{tpu_custom_call.1} parent=1 // pred_check
      _
    $region27: #{tpu_custom_call.1} parent=1 // pred_check_branch
      %49 = sbr.rel (0) target = $region29
    $region28: #{tpu_custom_call.1} parent=1 // pred_region
      %51 = dma.done [#allocation4], 128
    $region29: #{tpu_custom_call.1} parent=1 // pred_fallthru
      _
    // Predicated region
    $region30: #{tpu_custom_call.1} parent=1 // pred_check
      _
    $region31: #{tpu_custom_call.1} parent=1 // pred_check_branch
      %53 = sbr.rel (0) target = $region33
    $region32: #{tpu_custom_call.1} parent=1 // pred_region
      %55 = dma.done [#allocation7], 256
    $region33: #{tpu_custom_call.1} parent=1 // pred_fallthru
      _
    %v56 = vld [vmem:[#allocation3] sm:$0xff]
    %v57 = vld [vmem:[#allocation6] sm:$0xff]
    %v58 = vld [vmem:[#allocation6 + $0x8] sm:$0xff]
    %v59 = vld [vmem:[%s3] sm:$0x1]
    %v61 = vperm.slane %v59, 0
    %vm63 = vcmask 130048
    %v65 = vsel %vm63, %v56, 0
    %67 = vmatpush.msra.mxu0 0.0
    %68 = vmatpush.msra.mxu0 0.0
    %69 = vmatpush.msra.mxu0 0.0
    %70 = vmatpush.msra.mxu0 0.0
    %71 = vmatpush.msra.mxu0 0.0
    %72 = vmatpush.msra.mxu0 0.0
    %73 = vmatpush.msra.mxu0 0.0
    %74 = vmatpush.msra.mxu0 0.0
    %75 = vmatpush.msra.mxu0 0.0
    %76 = vmatpush.msra.mxu0 0.0
    %77 = vmatpush.msra.mxu0 0.0
    %78 = vmatpush.msra.mxu0 0.0
    %79 = vmatpush.msra.mxu0 0.0
    %80 = vmatpush.msra.mxu0 0.0
    %81 = vmatpush.msra.mxu0 %v58
    %82 = vmatpush.msra.mxu0 %v57
    %83 = vmatmul.f32.gmra.mxu0 %v65
    %v84 = vpop.f32.mrf.mxu0
    %v85 = vadd.f32 %v61, %v84
    %86 = vdwg.mxu0
    %v87 = vld [vmem:[%s0] sm:$0x1]
    %v88 = vld [vmem:[%s0 + $0x1] sm:$0x1]
    %v91 = vperm.slane %v87, 0
    %v92 = vperm.slane %v88, 0
    %v95 = vadd.f32 %v91, %v85
    %v96 = vadd.f32 %v92, %v85
    %v97 = vtanh.pop %v95
    %v98 = vtanh.pop %v96
    %v99 = vld [vmem:[%s4] sm:$0x1]
    %v101 = vperm.slane %v99, 0
    %v103 = vmul.f32 %v97, %v101
    %v104 = vmul.f32 %v98, %v101
    %vm105 = vcmask 261120
    %v106 = vsel %vm105, %v103, 0.0
    %107 = vadd.xlane.f32.xlu0 %v106
    %v108 = vpop.xlane.xlu0 %107
    %v109 = vsel %vm105, %v104, 0.0
    %110 = vadd.xlane.f32.xlu0 %v109
    %v111 = vpop.xlane.xlu0 %110
    %v112 = vld [vmem:[#allocation2] sm:$0x1]
    %v114 = vperm.slane %v112, 0
    %115 = vset.pattern.permute.xlu0 0
    %116 = vperm.xlu0 %115, %v114
    %v117 = vpop.permute.xlu0 %116
    %v119 = vadd.f32 %v108, %v117
    %v120 = vadd.f32 %v111, %v117
    %v123 = vlaneseq
    %v124 = vand.u32 %v123, 127
    %v125 = vperm.slane %v119, %v124
    %v126 = vperm.slane %v120, %v124
    %vm127 = vcmask 1041409
    %v128 = vsel %vm127, %v126, %v125
    %vm130 = vcmask 58368
    %131 = vst.msk [vmem:[#allocation8] sm:$0x3] %vm130, %v128
    // Predicated region
    $region34: #{tpu_custom_call.1} parent=1 // pred_check
      _
    $region35: #{tpu_custom_call.1} parent=1 // pred_check_branch
      %133 = sbr.rel (0) target = $region37
    $region36: #{tpu_custom_call.1} parent=1 // pred_region
      %135 = vsyncadd [#allocation5], 0
      %s137 = sshll.u32 [#allocation8], 4
      %s138 = int_to_ptr.vmem [resolvable:$true] %s137
      %s139 = sshll.u32 %s6, 4
      %s140 = int_to_ptr.hbm [resolvable:$true] %s139
      %142 = dma.vmem_to_hbm [thread:$0]  %s138, 32, %s140, [#allocation5]
    $region37: #{tpu_custom_call.1} parent=1 // pred_fallthru
      _
    // Predicated region
    $region38: #{tpu_custom_call.1} parent=1 // pred_check
      _
    $region39: #{tpu_custom_call.1} parent=1 // pred_check_branch
      %144 = sbr.rel (0) target = $region41
    $region40: #{tpu_custom_call.1} parent=1 // pred_region
      %146 = dma.done [#allocation5], 32
    $region41: #{tpu_custom_call.1} parent=1 // pred_fallthru
      _
    %147 = vsyncpa [#allocation4], 1
    %148 = vsyncpa [#allocation7], 1
    %149 = vsyncpa [#allocation5], 1

</llo_original>
